<compile_context>
chip_gen: v6e
topology: v6e:2x2x1
jax: 0.10.0
libtpu: 0.0.40
codegen_flags: <defaults>
</compile_context>

<pallas_src>
import numpy as np
import jax
import jax.numpy as jnp
from jax.experimental import pallas as pl
from jax.experimental.pallas import tpu as pltpu

NOISE_DIM = 64            # net.view(-1, 16, 8) requires noise_dim * 2 == 128
BATCH = 2
BN_EPS = 1e-5
NEG_SLOPE = 0.2
TILE_B = 256              # batch tile for large sample counts (multiple of 8)
WEIGHT_DTYPE = jnp.bfloat16   # full-rate MXU weights; accumulation stays f32


# ----------------------------------------------------------------------------- kernel
def _leaky(x):
    return jnp.where(x >= 0, x, NEG_SLOPE * x)


def _mm(h, w_ref):
    # Cast activations to the (bf16) weight dtype at the MXU boundary; accumulate in f32.
    return jnp.dot(h.astype(w_ref.dtype), w_ref[...], preferred_element_type=jnp.float32)


def generator_kernel(noise_ref,
                     w1_ref, b1_ref,      # Linear(64,64) + bias
                     w2_ref, bfc_ref,     # Linear(64,128,no bias) with BN(128) folded in
                     m1_ref, c1_ref,      # ConvT 16->16 s2 with BN(16) folded in
                     m2_ref, c2_ref,      # ConvT 16->8  s2 with BN(8)  folded in
                     m3_ref, c3_ref,      # ConvT 8->4   s2 with BN(4)  folded in
                     m4_ref, b4_ref,      # ConvT 4->1   s1 + bias
                     out_ref):
    x = noise_ref[...]                                        # (TB, 64) f32

    # FC block (Dropout is identity in eval mode)
    h = _leaky(_mm(x, w1_ref) + b1_ref[...])                  # (TB, 64)
    h = _leaky(_mm(h, w2_ref) + bfc_ref[...])                 # (TB, 128) == (TB,16,8) flat

    # CONV block (circular transposed convs as matmuls, BN folded into the weights)
    h = _leaky(_mm(h, m1_ref) + c1_ref[...])                  # (TB, 16*16)
    h = _leaky(_mm(h, m2_ref) + c2_ref[...])                  # (TB, 8*32)
    h = _leaky(_mm(h, m3_ref) + c3_ref[...])                  # (TB, 4*64)
    y = _mm(h, m4_ref) + b4_ref[...]                          # (TB, 64)

    # tanh((net + noise.unsqueeze(1)) * 100) * 1.05
    # NOTE: output last dim is 64 (<128 lanes) -> masked stores; negligible vs. the matmuls.
    out_ref[...] = jnp.tanh((y + x) * 100.0) * 1.05


# ----------------------------------------------------------------------------- build-time glue
def convT1d_circular_as_matrix(w, l_in, stride):
    """Lower a circular ConvTranspose1d (weight (C_in, C_out, K), PyTorch layout)
    to a dense matrix acting on channel-major flattened inputs."""
    c_in, c_out, k = w.shape
    n = stride * l_in
    mat = np.zeros((c_in * l_in, c_out * n), dtype=np.float32)
    for ci in range(c_in):
        for i in range(l_in):
            for j in range(k):
                m = (stride * i + j) % n
                mat[ci * l_in + i, np.arange(c_out) * n + m] += w[ci, :, j]
    return mat


def bn_eval_scale_shift(gamma, beta, running_mean, running_var):
    scale = gamma / np.sqrt(running_var + BN_EPS)
    shift = beta - running_mean * scale
    return scale.astype(np.float32), shift.astype(np.float32)


def build_params(rng):
    """Synthetic weights; eval-mode BN affines folded into the preceding matmul."""
    p = {}
    # FC
    p["w1"] = rng.normal(0, 0.1, (NOISE_DIM, NOISE_DIM)).astype(np.float32)      # (in, out)
    p["b1"] = rng.normal(0, 0.1, (1, NOISE_DIM)).astype(np.float32)

    w2 = rng.normal(0, 0.1, (NOISE_DIM, 2 * NOISE_DIM)).astype(np.float32)
    g = rng.uniform(0.8, 1.2, 2 * NOISE_DIM); b = rng.normal(0, 0.05, 2 * NOISE_DIM)
    rm = rng.normal(0, 0.05, 2 * NOISE_DIM); rv = rng.uniform(0.8, 1.2, 2 * NOISE_DIM)
    sc, sh = bn_eval_scale_shift(g, b, rm, rv)
    p["w2"] = (w2 * sc[None, :]).astype(np.float32)
    p["bfc"] = sh[None, :].astype(np.float32)

    # CONV: (C_in, C_out, K, stride, L_in)
    conv_cfg = [(16, 16, 5, 2, 8), (16, 8, 5, 2, 16), (8, 4, 5, 2, 32), (4, 1, 5, 1, 64)]
    for idx, (ci, co, k, s, lin) in enumerate(conv_cfg, start=1):
        w = rng.normal(0, 0.1, (ci, co, k)).astype(np.float32)
        m = convT1d_circular_as_matrix(w, lin, s)
        lout = s * lin
        if idx < 4:   # followed by BatchNorm1d(co): fold scale into columns, keep shift as bias
            g = rng.uniform(0.8, 1.2, co); b = rng.normal(0, 0.05, co)
            rm = rng.normal(0, 0.05, co); rv = rng.uniform(0.8, 1.2, co)
            sc, sh = bn_eval_scale_shift(g, b, rm, rv)
            p[f"m{idx}"] = (m * np.repeat(sc, lout)[None, :]).astype(np.float32)
            p[f"c{idx}"] = np.repeat(sh, lout)[None, :].astype(np.float32)
        else:         # last ConvT has a per-out-channel bias, broadcast over length
            bias = rng.normal(0, 0.1, co).astype(np.float32)
            p["m4"] = m
            p["b4"] = np.repeat(bias, lout)[None, :].astype(np.float32)
    return p


def prepare_device_params(p):
    """Upload once: weight matrices in bf16 (MXU), bias rows in f32."""
    w = lambda a: jnp.asarray(a, WEIGHT_DTYPE)
    f = lambda a: jnp.asarray(a, jnp.float32)
    return (w(p["w1"]), f(p["b1"]),
            w(p["w2"]), f(p["bfc"]),
            w(p["m1"]), f(p["c1"]),
            w(p["m2"]), f(p["c2"]),
            w(p["m3"]), f(p["c3"]),
            w(p["m4"]), f(p["b4"]))


# ----------------------------------------------------------------------------- wrapper
def _forward_pallas(noise, *weights):
    b = noise.shape[0]
    tb = b if b <= TILE_B else TILE_B          # b > TILE_B is always padded to a multiple
    grid = (b // tb,)

    io_spec = pl.BlockSpec((tb, NOISE_DIM), lambda i: (i, 0))
    # Weights: full-array blocks at a constant block index -> stay VMEM-resident across grid.
    weight_specs = [pl.BlockSpec(wt.shape, lambda i: (0, 0)) for wt in weights]

    return pl.pallas_call(
        generator_kernel,
        out_shape=jax.ShapeDtypeStruct((b, NOISE_DIM), jnp.float32),
        grid=grid,
        in_specs=[io_spec] + weight_specs,
        out_specs=io_spec,
        compiler_params=pltpu.CompilerParams(
            dimension_semantics=("parallel",)),   # v7x: split batch tiles across the 2 TCs
    )(noise, *weights)


@jax.jit
def _generator_forward_jit(noise, weights):
    noise = noise.astype(jnp.float32)
    b = noise.shape[0]
    if b > TILE_B:
        pad = (-b) % TILE_B
        if pad:
            noise_p = jnp.pad(noise, ((0, pad), (0, 0)))
        else:
            noise_p = noise
        out = _forward_pallas(noise_p, *weights)[:b]
    else:
        out = _forward_pallas(noise, *weights)
    return out.reshape(b, 1, NOISE_DIM)          # match torch output (B, 1, 64)


class GeneratorPallas:
    """Holds device-resident (pre-folded) params; __call__ is jitted, no re-upload."""

    def __init__(self, np_params):
        self.weights = prepare_device_params(np_params)

    def __call__(self, noise):
        return _generator_forward_jit(jnp.asarray(noise), self.weights)


# ----------------------------------------------------------------------------- main
if __name__ == "__main__":
    params = build_params(np.random.default_rng(0))
    gen = GeneratorPallas(params)

    # Small deterministic example (matches the module's expected (B, noise_dim) input).
    noise = jax.random.normal(jax.random.PRNGKey(0), (BATCH, NOISE_DIM), dtype=jnp.float32)
    out = gen(noise)
    jax.block_until_ready(out)
    assert out.shape == (BATCH, 1, NOISE_DIM) and out.dtype == jnp.float32
    assert bool(jnp.all(jnp.isfinite(out)))

    # Exercise the batched / gridded (padded, multi-tile, megacore-parallel) path once.
    big_noise = jax.random.normal(jax.random.PRNGKey(1), (600, NOISE_DIM), dtype=jnp.float32)
    big_out = gen(big_noise)
    jax.block_until_ready(big_out)
    assert big_out.shape == (600, 1, NOISE_DIM)

    print("KERNEL_OK")
</pallas_src>

<mosaic_0001>
module attributes {stable_mosaic.version = 11 : i64} {
  func.func @generator_kernel(%arg0: i32, %arg1: memref<2x64xf32, #tpu.memory_space<vmem>>, %arg2: memref<64x64xbf16, #tpu.memory_space<vmem>>, %arg3: memref<1x64xf32, #tpu.memory_space<vmem>>, %arg4: memref<64x128xbf16, #tpu.memory_space<vmem>>, %arg5: memref<1x128xf32, #tpu.memory_space<vmem>>, %arg6: memref<128x256xbf16, #tpu.memory_space<vmem>>, %arg7: memref<1x256xf32, #tpu.memory_space<vmem>>, %arg8: memref<256x256xbf16, #tpu.memory_space<vmem>>, %arg9: memref<1x256xf32, #tpu.memory_space<vmem>>, %arg10: memref<256x256xbf16, #tpu.memory_space<vmem>>, %arg11: memref<1x256xf32, #tpu.memory_space<vmem>>, %arg12: memref<256x64xbf16, #tpu.memory_space<vmem>>, %arg13: memref<1x64xf32, #tpu.memory_space<vmem>>, %arg14: memref<2x64xf32, #tpu.memory_space<vmem>>) attributes {dimension_semantics = [#tpu.dimension_semantics<parallel>], iteration_bounds = array<i64: 1>, scalar_prefetch = 0 : i64, scratch_operands = 0 : i64, tpu.core_type = #tpu.core_type<tc>, window_params = [{transform_indices = @transform_0, window_bounds = array<i64: 2, 64>}, {pipeline_mode = #tpu.pipeline_mode<synchronous>, transform_indices = @transform_1, window_bounds = array<i64: 64, 64>}, {pipeline_mode = #tpu.pipeline_mode<synchronous>, transform_indices = @transform_2, window_bounds = array<i64: 1, 64>}, {pipeline_mode = #tpu.pipeline_mode<synchronous>, transform_indices = @transform_3, window_bounds = array<i64: 64, 128>}, {pipeline_mode = #tpu.pipeline_mode<synchronous>, transform_indices = @transform_4, window_bounds = array<i64: 1, 128>}, {pipeline_mode = #tpu.pipeline_mode<synchronous>, transform_indices = @transform_5, window_bounds = array<i64: 128, 256>}, {pipeline_mode = #tpu.pipeline_mode<synchronous>, transform_indices = @transform_6, window_bounds = array<i64: 1, 256>}, {pipeline_mode = #tpu.pipeline_mode<synchronous>, transform_indices = @transform_7, window_bounds = array<i64: 256, 256>}, {pipeline_mode = #tpu.pipeline_mode<synchronous>, transform_indices = @transform_8, window_bounds = array<i64: 1, 256>}, {pipeline_mode = #tpu.pipeline_mode<synchronous>, transform_indices = @transform_9, window_bounds = array<i64: 256, 256>}, {pipeline_mode = #tpu.pipeline_mode<synchronous>, transform_indices = @transform_10, window_bounds = array<i64: 1, 256>}, {pipeline_mode = #tpu.pipeline_mode<synchronous>, transform_indices = @transform_11, window_bounds = array<i64: 256, 64>}, {pipeline_mode = #tpu.pipeline_mode<synchronous>, transform_indices = @transform_12, window_bounds = array<i64: 1, 64>}, {transform_indices = @transform_13, window_bounds = array<i64: 2, 64>}]} {
    %c0 = arith.constant 0 : index
    %c0_0 = arith.constant 0 : index
    %0 = vector.load %arg1[%c0, %c0_0] : memref<2x64xf32, #tpu.memory_space<vmem>>, vector<2x64xf32>
    %1 = arith.truncf %0 : vector<2x64xf32> to vector<2x64xbf16>
    %c0_1 = arith.constant 0 : index
    %c0_2 = arith.constant 0 : index
    %2 = vector.load %arg2[%c0_1, %c0_2] : memref<64x64xbf16, #tpu.memory_space<vmem>>, vector<64x64xbf16>
    %cst = arith.constant dense<0.000000e+00> : vector<2x64xf32>
    %3 = tpu.matmul %1, %2, %cst {dimension_numbers = #tpu.dot_dimension_numbers<[1], [0], [0], [1], [0, 0, 1, 1], [], []>} : vector<2x64xbf16>, vector<64x64xbf16>, vector<2x64xf32> -> vector<2x64xf32>
    %c0_3 = arith.constant 0 : index
    %c0_4 = arith.constant 0 : index
    %4 = vector.load %arg3[%c0_3, %c0_4] : memref<1x64xf32, #tpu.memory_space<vmem>>, vector<1x64xf32>
    %5 = vector.broadcast %4 : vector<1x64xf32> to vector<2x64xf32>
    %6 = arith.addf %3, %5 : vector<2x64xf32>
    %cst_5 = arith.constant 0.000000e+00 : f32
    %7 = vector.broadcast %cst_5 : f32 to vector<2x64xf32>
    %8 = arith.cmpf oge, %6, %7 : vector<2x64xf32>
    %cst_6 = arith.constant 2.000000e-01 : f32
    %9 = vector.broadcast %cst_6 : f32 to vector<2x64xf32>
    %10 = arith.mulf %9, %6 : vector<2x64xf32>
    %11 = arith.select %8, %6, %10 : vector<2x64xi1>, vector<2x64xf32>
    %12 = arith.truncf %11 : vector<2x64xf32> to vector<2x64xbf16>
    %c0_7 = arith.constant 0 : index
    %c0_8 = arith.constant 0 : index
    %13 = vector.load %arg4[%c0_7, %c0_8] : memref<64x128xbf16, #tpu.memory_space<vmem>>, vector<64x128xbf16>
    %cst_9 = arith.constant dense<0.000000e+00> : vector<2x128xf32>
    %14 = tpu.matmul %12, %13, %cst_9 {dimension_numbers = #tpu.dot_dimension_numbers<[1], [0], [0], [1], [0, 0, 1, 1], [], []>} : vector<2x64xbf16>, vector<64x128xbf16>, vector<2x128xf32> -> vector<2x128xf32>
    %c0_10 = arith.constant 0 : index
    %c0_11 = arith.constant 0 : index
    %15 = vector.load %arg5[%c0_10, %c0_11] : memref<1x128xf32, #tpu.memory_space<vmem>>, vector<1x128xf32>
    %16 = vector.broadcast %15 : vector<1x128xf32> to vector<2x128xf32>
    %17 = arith.addf %14, %16 : vector<2x128xf32>
    %cst_12 = arith.constant 0.000000e+00 : f32
    %18 = vector.broadcast %cst_12 : f32 to vector<2x128xf32>
    %19 = arith.cmpf oge, %17, %18 : vector<2x128xf32>
    %cst_13 = arith.constant 2.000000e-01 : f32
    %20 = vector.broadcast %cst_13 : f32 to vector<2x128xf32>
    %21 = arith.mulf %20, %17 : vector<2x128xf32>
    %22 = arith.select %19, %17, %21 : vector<2x128xi1>, vector<2x128xf32>
    %23 = arith.truncf %22 : vector<2x128xf32> to vector<2x128xbf16>
    %c0_14 = arith.constant 0 : index
    %c0_15 = arith.constant 0 : index
    %24 = vector.load %arg6[%c0_14, %c0_15] : memref<128x256xbf16, #tpu.memory_space<vmem>>, vector<128x256xbf16>
    %cst_16 = arith.constant dense<0.000000e+00> : vector<2x256xf32>
    %25 = tpu.matmul %23, %24, %cst_16 {dimension_numbers = #tpu.dot_dimension_numbers<[1], [0], [0], [1], [0, 0, 1, 1], [], []>} : vector<2x128xbf16>, vector<128x256xbf16>, vector<2x256xf32> -> vector<2x256xf32>
    %c0_17 = arith.constant 0 : index
    %c0_18 = arith.constant 0 : index
    %26 = vector.load %arg7[%c0_17, %c0_18] : memref<1x256xf32, #tpu.memory_space<vmem>>, vector<1x256xf32>
    %27 = vector.broadcast %26 : vector<1x256xf32> to vector<2x256xf32>
    %28 = arith.addf %25, %27 : vector<2x256xf32>
    %cst_19 = arith.constant 0.000000e+00 : f32
    %29 = vector.broadcast %cst_19 : f32 to vector<2x256xf32>
    %30 = arith.cmpf oge, %28, %29 : vector<2x256xf32>
    %cst_20 = arith.constant 2.000000e-01 : f32
    %31 = vector.broadcast %cst_20 : f32 to vector<2x256xf32>
    %32 = arith.mulf %31, %28 : vector<2x256xf32>
    %33 = arith.select %30, %28, %32 : vector<2x256xi1>, vector<2x256xf32>
    %34 = arith.truncf %33 : vector<2x256xf32> to vector<2x256xbf16>
    %c0_21 = arith.constant 0 : index
    %c0_22 = arith.constant 0 : index
    %35 = vector.load %arg8[%c0_21, %c0_22] : memref<256x256xbf16, #tpu.memory_space<vmem>>, vector<256x256xbf16>
    %cst_23 = arith.constant dense<0.000000e+00> : vector<2x256xf32>
    %36 = tpu.matmul %34, %35, %cst_23 {dimension_numbers = #tpu.dot_dimension_numbers<[1], [0], [0], [1], [0, 0, 1, 1], [], []>} : vector<2x256xbf16>, vector<256x256xbf16>, vector<2x256xf32> -> vector<2x256xf32>
    %c0_24 = arith.constant 0 : index
    %c0_25 = arith.constant 0 : index
    %37 = vector.load %arg9[%c0_24, %c0_25] : memref<1x256xf32, #tpu.memory_space<vmem>>, vector<1x256xf32>
    %38 = vector.broadcast %37 : vector<1x256xf32> to vector<2x256xf32>
    %39 = arith.addf %36, %38 : vector<2x256xf32>
    %cst_26 = arith.constant 0.000000e+00 : f32
    %40 = vector.broadcast %cst_26 : f32 to vector<2x256xf32>
    %41 = arith.cmpf oge, %39, %40 : vector<2x256xf32>
    %cst_27 = arith.constant 2.000000e-01 : f32
    %42 = vector.broadcast %cst_27 : f32 to vector<2x256xf32>
    %43 = arith.mulf %42, %39 : vector<2x256xf32>
    %44 = arith.select %41, %39, %43 : vector<2x256xi1>, vector<2x256xf32>
    %45 = arith.truncf %44 : vector<2x256xf32> to vector<2x256xbf16>
    %c0_28 = arith.constant 0 : index
    %c0_29 = arith.constant 0 : index
    %46 = vector.load %arg10[%c0_28, %c0_29] : memref<256x256xbf16, #tpu.memory_space<vmem>>, vector<256x256xbf16>
    %cst_30 = arith.constant dense<0.000000e+00> : vector<2x256xf32>
    %47 = tpu.matmul %45, %46, %cst_30 {dimension_numbers = #tpu.dot_dimension_numbers<[1], [0], [0], [1], [0, 0, 1, 1], [], []>} : vector<2x256xbf16>, vector<256x256xbf16>, vector<2x256xf32> -> vector<2x256xf32>
    %c0_31 = arith.constant 0 : index
    %c0_32 = arith.constant 0 : index
    %48 = vector.load %arg11[%c0_31, %c0_32] : memref<1x256xf32, #tpu.memory_space<vmem>>, vector<1x256xf32>
    %49 = vector.broadcast %48 : vector<1x256xf32> to vector<2x256xf32>
    %50 = arith.addf %47, %49 : vector<2x256xf32>
    %cst_33 = arith.constant 0.000000e+00 : f32
    %51 = vector.broadcast %cst_33 : f32 to vector<2x256xf32>
    %52 = arith.cmpf oge, %50, %51 : vector<2x256xf32>
    %cst_34 = arith.constant 2.000000e-01 : f32
    %53 = vector.broadcast %cst_34 : f32 to vector<2x256xf32>
    %54 = arith.mulf %53, %50 : vector<2x256xf32>
    %55 = arith.select %52, %50, %54 : vector<2x256xi1>, vector<2x256xf32>
    %56 = arith.truncf %55 : vector<2x256xf32> to vector<2x256xbf16>
    %c0_35 = arith.constant 0 : index
    %c0_36 = arith.constant 0 : index
    %57 = vector.load %arg12[%c0_35, %c0_36] : memref<256x64xbf16, #tpu.memory_space<vmem>>, vector<256x64xbf16>
    %cst_37 = arith.constant dense<0.000000e+00> : vector<2x64xf32>
    %58 = tpu.matmul %56, %57, %cst_37 {dimension_numbers = #tpu.dot_dimension_numbers<[1], [0], [0], [1], [0, 0, 1, 1], [], []>} : vector<2x256xbf16>, vector<256x64xbf16>, vector<2x64xf32> -> vector<2x64xf32>
    %c0_38 = arith.constant 0 : index
    %c0_39 = arith.constant 0 : index
    %59 = vector.load %arg13[%c0_38, %c0_39] : memref<1x64xf32, #tpu.memory_space<vmem>>, vector<1x64xf32>
    %60 = vector.broadcast %59 : vector<1x64xf32> to vector<2x64xf32>
    %61 = arith.addf %58, %60 : vector<2x64xf32>
    %62 = arith.addf %61, %0 : vector<2x64xf32>
    %cst_40 = arith.constant 1.000000e+02 : f32
    %63 = vector.broadcast %cst_40 : f32 to vector<2x64xf32>
    %64 = arith.mulf %62, %63 : vector<2x64xf32>
    %65 = math.tanh %64 : vector<2x64xf32>
    %cst_41 = arith.constant 1.050000e+00 : f32
    %66 = vector.broadcast %cst_41 : f32 to vector<2x64xf32>
    %67 = arith.mulf %65, %66 : vector<2x64xf32>
    %c0_42 = arith.constant 0 : index
    %c0_43 = arith.constant 0 : index
    %68 = vector.load %arg14[%c0_42, %c0_43] : memref<2x64xf32, #tpu.memory_space<vmem>>, vector<2x64xf32>
    tpu.vector_store %arg14[%c0_42, %c0_43], %67 {strides = array<i32>} : memref<2x64xf32, #tpu.memory_space<vmem>>, vector<2x64xf32>,
    return
  }
  func.func @transform_0(%arg0: i32) -> (i32, i32) {
    %c0_i32 = arith.constant 0 : i32
    %c0_i32_0 = arith.constant 0 : i32
    return %arg0, %c0_i32 : i32, i32
  }
  func.func @transform_1(%arg0: i32) -> (i32, i32) {
    %c0_i32 = arith.constant 0 : i32
    %c0_i32_0 = arith.constant 0 : i32
    %c0_i32_1 = arith.constant 0 : i32
    return %c0_i32, %c0_i32_0 : i32, i32
  }
  func.func @transform_2(%arg0: i32) -> (i32, i32) {
    %c0_i32 = arith.constant 0 : i32
    %c0_i32_0 = arith.constant 0 : i32
    %c0_i32_1 = arith.constant 0 : i32
    return %c0_i32, %c0_i32_0 : i32, i32
  }
  func.func @transform_3(%arg0: i32) -> (i32, i32) {
    %c0_i32 = arith.constant 0 : i32
    %c0_i32_0 = arith.constant 0 : i32
    %c0_i32_1 = arith.constant 0 : i32
    return %c0_i32, %c0_i32_0 : i32, i32
  }
  func.func @transform_4(%arg0: i32) -> (i32, i32) {
    %c0_i32 = arith.constant 0 : i32
    %c0_i32_0 = arith.constant 0 : i32
    %c0_i32_1 = arith.constant 0 : i32
    return %c0_i32, %c0_i32_0 : i32, i32
  }
  func.func @transform_5(%arg0: i32) -> (i32, i32) {
    %c0_i32 = arith.constant 0 : i32
    %c0_i32_0 = arith.constant 0 : i32
    %c0_i32_1 = arith.constant 0 : i32
    return %c0_i32, %c0_i32_0 : i32, i32
  }
  func.func @transform_6(%arg0: i32) -> (i32, i32) {
    %c0_i32 = arith.constant 0 : i32
    %c0_i32_0 = arith.constant 0 : i32
    %c0_i32_1 = arith.constant 0 : i32
    return %c0_i32, %c0_i32_0 : i32, i32
  }
  func.func @transform_7(%arg0: i32) -> (i32, i32) {
    %c0_i32 = arith.constant 0 : i32
    %c0_i32_0 = arith.constant 0 : i32
    %c0_i32_1 = arith.constant 0 : i32
    return %c0_i32, %c0_i32_0 : i32, i32
  }
  func.func @transform_8(%arg0: i32) -> (i32, i32) {
    %c0_i32 = arith.constant 0 : i32
    %c0_i32_0 = arith.constant 0 : i32
    %c0_i32_1 = arith.constant 0 : i32
    return %c0_i32, %c0_i32_0 : i32, i32
  }
  func.func @transform_9(%arg0: i32) -> (i32, i32) {
    %c0_i32 = arith.constant 0 : i32
    %c0_i32_0 = arith.constant 0 : i32
    %c0_i32_1 = arith.constant 0 : i32
    return %c0_i32, %c0_i32_0 : i32, i32
  }
  func.func @transform_10(%arg0: i32) -> (i32, i32) {
    %c0_i32 = arith.constant 0 : i32
    %c0_i32_0 = arith.constant 0 : i32
    %c0_i32_1 = arith.constant 0 : i32
    return %c0_i32, %c0_i32_0 : i32, i32
  }
  func.func @transform_11(%arg0: i32) -> (i32, i32) {
    %c0_i32 = arith.constant 0 : i32
    %c0_i32_0 = arith.constant 0 : i32
    %c0_i32_1 = arith.constant 0 : i32
    return %c0_i32, %c0_i32_0 : i32, i32
  }
  func.func @transform_12(%arg0: i32) -> (i32, i32) {
    %c0_i32 = arith.constant 0 : i32
    %c0_i32_0 = arith.constant 0 : i32
    %c0_i32_1 = arith.constant 0 : i32
    return %c0_i32, %c0_i32_0 : i32, i32
  }
  func.func @transform_13(%arg0: i32) -> (i32, i32) {
    %c0_i32 = arith.constant 0 : i32
    %c0_i32_0 = arith.constant 0 : i32
    return %arg0, %c0_i32 : i32, i32
  }
}

</mosaic_0001>

<llo_original>
// kernel: _generator_forward_jit.1
$region0: #{_generator_forward_jit.1}
  #allocation0 [shape = 'u32[]', space=smem, size = 0x4, offset = 0x4, fixed_abs, tag = 'smem constant byte address 0x4 - core index']
  #allocation1 [shape = 'u32[144,128]{1,0:T(1,128)}', space=vmem, size = 0x12000, scoped, tag = 'internal scratch']
  %s0 = inlined_call_operand.vmem [shape: f32[2,64], index: 0, kind: input, shape index: {}]
  %s1 = inlined_call_operand.vmem [shape: bf16[64,64], index: 1, kind: input, shape index: {}]
  %s2 = inlined_call_operand.vmem [shape: f32[1,64], index: 2, kind: input, shape index: {}]
  %s3 = inlined_call_operand.vmem [shape: bf16[64,128], index: 3, kind: input, shape index: {}]
  %s4 = inlined_call_operand.hbm [shape: f32[1,128], index: 4, kind: input, shape index: {}]
  %s5 = inlined_call_operand.vmem [shape: bf16[128,256], index: 5, kind: input, shape index: {}]
  %s6 = inlined_call_operand.vmem [shape: f32[1,256], index: 6, kind: input, shape index: {}]
  %s7 = inlined_call_operand.hbm [shape: bf16[256,256], index: 7, kind: input, shape index: {}]
  %s8 = inlined_call_operand.vmem [shape: f32[1,256], index: 8, kind: input, shape index: {}]
  %s9 = inlined_call_operand.hbm [shape: bf16[256,256], index: 9, kind: input, shape index: {}]
  %s10 = inlined_call_operand.vmem [shape: f32[1,256], index: 10, kind: input, shape index: {}]
  %s11 = inlined_call_operand.vmem [shape: bf16[256,64], index: 11, kind: input, shape index: {}]
  %s12 = inlined_call_operand.vmem [shape: f32[1,64], index: 12, kind: input, shape index: {}]
  %s13 = inlined_call_operand.hbm [shape: f32[2,64], index: 13, kind: output, shape index: {}]
  %s14 = sld [smem:[#allocation0]]
  $region74: #{_generator_forward_jit.1} parent=0
    _
  %s16 = ssub.s32 1, %s14
  %s17 = scalar_select 0, %s16, %s14
  $region1: #{_generator_forward_jit.1} parent=0
    #allocation2 [shape = 'u8[512]{0}', space=vmem, size = 0x400, scoped, tag = 'input window, operand 4, single buffered']
    #allocation3 [shape = 's32[1]{0}', space=sflag, size = 0x4, scoped, tag = 'scoped memory for _generator_forward_jit.1']
    #allocation4 [shape = 's32[1]{0}', space=sflag, size = 0x4, scoped, tag = 'scoped memory for _generator_forward_jit.1']
    #allocation5 [shape = 'u8[131072]{0}', space=vmem, size = 0x20000, scoped, tag = 'input window, operand 7, single buffered']
    #allocation6 [shape = 's32[1]{0}', space=sflag, size = 0x4, scoped, tag = 'scoped memory for _generator_forward_jit.1']
    #allocation7 [shape = 'u8[131072]{0}', space=vmem, size = 0x20000, scoped, tag = 'input window, operand 9, single buffered']
    #allocation8 [shape = 'u8[1024]{0}', space=vmem, size = 0x400, scoped, tag = 'output window, operand 0, single buffered']
    %18 = vsyncpa [#allocation3], 0
    %19 = vsyncpa [#allocation6], 0
    %20 = vsyncpa [#allocation4], 0
    // Predicated region
    $region2: #{_generator_forward_jit.1} parent=1 // pred_check
      _
    $region3: #{_generator_forward_jit.1} parent=1 // pred_check_branch
      %22 = sbr.rel (0) target = $region5
    $region4: #{_generator_forward_jit.1} parent=1 // pred_region
      _
    $region5: #{_generator_forward_jit.1} parent=1 // pred_fallthru
      _
    // Predicated region
    $region6: #{_generator_forward_jit.1} parent=1 // pred_check
      _
    $region7: #{_generator_forward_jit.1} parent=1 // pred_check_branch
      %24 = sbr.rel (0) target = $region9
    $region8: #{_generator_forward_jit.1} parent=1 // pred_region
      _
    $region9: #{_generator_forward_jit.1} parent=1 // pred_fallthru
      _
    // Predicated region
    $region10: #{_generator_forward_jit.1} parent=1 // pred_check
      _
    $region11: #{_generator_forward_jit.1} parent=1 // pred_check_branch
      %26 = sbr.rel (0) target = $region13
    $region12: #{_generator_forward_jit.1} parent=1 // pred_region
      _
    $region13: #{_generator_forward_jit.1} parent=1 // pred_fallthru
      _
    // Predicated region
    $region14: #{_generator_forward_jit.1} parent=1 // pred_check
      _
    $region15: #{_generator_forward_jit.1} parent=1 // pred_check_branch
      %28 = sbr.rel (0) target = $region17
    $region16: #{_generator_forward_jit.1} parent=1 // pred_region
      _
    $region17: #{_generator_forward_jit.1} parent=1 // pred_fallthru
      _
    // Predicated region
    $region18: #{_generator_forward_jit.1} parent=1 // pred_check
      _
    $region19: #{_generator_forward_jit.1} parent=1 // pred_check_branch
      %30 = sbr.rel (0) target = $region21
    $region20: #{_generator_forward_jit.1} parent=1 // pred_region
      %s32 = ssub.s32 16, 16
      %33 = vsyncadd [#allocation3], %s32
      %s35 = sshll.u32 [#allocation2], 4
      %s36 = int_to_ptr.vmem [resolvable:$true] %s35
      %38 = dma.hbm_to_vmem [thread:$0]  %s4, 16, %s36, [#allocation3]
    $region21: #{_generator_forward_jit.1} parent=1 // pred_fallthru
      _
    // Predicated region
    $region22: #{_generator_forward_jit.1} parent=1 // pred_check
      _
    $region23: #{_generator_forward_jit.1} parent=1 // pred_check_branch
      %40 = sbr.rel (0) target = $region25
    $region24: #{_generator_forward_jit.1} parent=1 // pred_region
      _
    $region25: #{_generator_forward_jit.1} parent=1 // pred_fallthru
      _
    // Predicated region
    $region26: #{_generator_forward_jit.1} parent=1 // pred_check
      _
    $region27: #{_generator_forward_jit.1} parent=1 // pred_check_branch
      %42 = sbr.rel (0) target = $region29
    $region28: #{_generator_forward_jit.1} parent=1 // pred_region
      _
    $region29: #{_generator_forward_jit.1} parent=1 // pred_fallthru
      _
    // Predicated region
    $region30: #{_generator_forward_jit.1} parent=1 // pred_check
      _
    $region31: #{_generator_forward_jit.1} parent=1 // pred_check_branch
      %44 = sbr.rel (0) target = $region33
    $region32: #{_generator_forward_jit.1} parent=1 // pred_region
      %s46 = ssub.s32 4096, 4096
      %47 = vsyncadd [#allocation6], %s46
      %s48 = sshll.u32 [#allocation5], 4
      %s49 = int_to_ptr.vmem [resolvable:$true] %s48
      %54 = dma.hbm_to_vmem [thread:$0]  %s7, 4096, %s49, [#allocation6], 128, 128, 8
    $region33: #{_generator_forward_jit.1} parent=1 // pred_fallthru
      _
    // Predicated region
    $region34: #{_generator_forward_jit.1} parent=1 // pred_check
      _
    $region35: #{_generator_forward_jit.1} parent=1 // pred_check_branch
      %56 = sbr.rel (0) target = $region37
    $region36: #{_generator_forward_jit.1} parent=1 // pred_region
      _
    $region37: #{_generator_forward_jit.1} parent=1 // pred_fallthru
      _
    // Predicated region
    $region38: #{_generator_forward_jit.1} parent=1 // pred_check
      _
    $region39: #{_generator_forward_jit.1} parent=1 // pred_check_branch
      %58 = sbr.rel (0) target = $region41
    $region40: #{_generator_forward_jit.1} parent=1 // pred_region
      %s60 = ssub.s32 4096, 4096
      %61 = vsyncadd [#allocation6], %s60
      %s62 = sshll.u32 [#allocation7], 4
      %s63 = int_to_ptr.vmem [resolvable:$true] %s62
      %68 = dma.hbm_to_vmem [thread:$0]  %s9, 4096, %s63, [#allocation6], 128, 128, 8
    $region41: #{_generator_forward_jit.1} parent=1 // pred_fallthru
      _
    // Predicated region
    $region42: #{_generator_forward_jit.1} parent=1 // pred_check
      _
    $region43: #{_generator_forward_jit.1} parent=1 // pred_check_branch
      %70 = sbr.rel (0) target = $region45
    $region44: #{_generator_forward_jit.1} parent=1 // pred_region
      _
    $region45: #{_generator_forward_jit.1} parent=1 // pred_fallthru
      _
    // Predicated region
    $region46: #{_generator_forward_jit.1} parent=1 // pred_check
      _
    $region47: #{_generator_forward_jit.1} parent=1 // pred_check_branch
      %72 = sbr.rel (0) target = $region49
    $region48: #{_generator_forward_jit.1} parent=1 // pred_region
      _
    $region49: #{_generator_forward_jit.1} parent=1 // pred_fallthru
      _
    // Predicated region
    $region50: #{_generator_forward_jit.1} parent=1 // pred_check
      _
    $region51: #{_generator_forward_jit.1} parent=1 // pred_check_branch
      %74 = sbr.rel (0) target = $region53
    $region52: #{_generator_forward_jit.1} parent=1 // pred_region
      _
    $region53: #{_generator_forward_jit.1} parent=1 // pred_fallthru
      _
    // Predicated region
    $region54: #{_generator_forward_jit.1} parent=1 // pred_check
      _
    $region55: #{_generator_forward_jit.1} parent=1 // pred_check_branch
      %76 = sbr.rel (0) target = $region57
    $region56: #{_generator_forward_jit.1} parent=1 // pred_region
      %77 = dma.done [#allocation3], 16
    $region57: #{_generator_forward_jit.1} parent=1 // pred_fallthru
      _
    // Predicated region
    $region58: #{_generator_forward_jit.1} parent=1 // pred_check
      _
    $region59: #{_generator_forward_jit.1} parent=1 // pred_check_branch
      %79 = sbr.rel (0) target = $region61
    $region60: #{_generator_forward_jit.1} parent=1 // pred_region
      %80 = dma.done [#allocation6], 4096
    $region61: #{_generator_forward_jit.1} parent=1 // pred_fallthru
      _
    // Predicated region
    $region62: #{_generator_forward_jit.1} parent=1 // pred_check
      _
    $region63: #{_generator_forward_jit.1} parent=1 // pred_check_branch
      %82 = sbr.rel (0) target = $region65
    $region64: #{_generator_forward_jit.1} parent=1 // pred_region
      %83 = dma.done [#allocation6], 4096
    $region65: #{_generator_forward_jit.1} parent=1 // pred_fallthru
      _
    %v85 = vld [vmem:[%s0] sm:$0x3]
    %v86 = vpack.c.bf16 %v85, %v85
    %v87 = vld [vmem:[%s1] sm:$0xf]
    %v88 = vld [vmem:[%s1 + $0x4] sm:$0xf]
    %v89 = vld [vmem:[%s1 + $0x8] sm:$0xf]
    %v90 = vld [vmem:[%s1 + $0xc] sm:$0xf]
    %v91 = vld [vmem:[%s1 + $0x10] sm:$0xf]
    %v92 = vld [vmem:[%s1 + $0x14] sm:$0xf]
    %v93 = vld [vmem:[%s1 + $0x18] sm:$0xf]
    %v94 = vld [vmem:[%s1 + $0x1c] sm:$0xf]
    %v95 = vld [vmem:[%s2] sm:$0x1]
    %v97 = vlaneseq
    %v98 = vshrl.u32 %v97, 7
    %v99 = vsub.s32 0, %v98
    %v100 = vrot.slane %v95, %v99
    %v110 = vunpack.c.l.b16 %v87
    %v111 = vunpack.c.l.b16 %v88
    %v112 = vunpack.c.l.b16 %v89
    %v113 = vunpack.c.l.b16 %v90
    %v114 = vunpack.c.l.b16 %v91
    %v115 = vunpack.c.l.b16 %v92
    %v116 = vunpack.c.l.b16 %v93
    %v117 = vunpack.c.l.b16 %v94
    %v118 = vpack.c.b16 %v111, %v110
    %v119 = vpack.c.b16 %v113, %v112
    %v120 = vpack.c.b16 %v115, %v114
    %v121 = vpack.c.b16 %v117, %v116
    %vm126 = vcmask 523264
    %v128 = vsel %vm126, %v86, 0
    %130 = vmatprep.subr.bf16.mxu0 0
    %131 = vmatpush1.bf16.msra.mxu0 0
    %132 = vmatprep.subr.bf16.mxu0 0
    %133 = vmatpush1.bf16.msra.mxu0 0
    %134 = vmatprep.subr.bf16.mxu0 0
    %135 = vmatpush1.bf16.msra.mxu0 0
    %136 = vmatprep.subr.bf16.mxu0 0
    %137 = vmatpush1.bf16.msra.mxu0 0
    %138 = vmatprep.subr.bf16.mxu0 0
    %139 = vmatpush1.bf16.msra.mxu0 %v121
    %140 = vmatprep.subr.bf16.mxu0 0
    %141 = vmatpush1.bf16.msra.mxu0 %v120
    %142 = vmatprep.subr.bf16.mxu0 0
    %143 = vmatpush1.bf16.msra.mxu0 %v119
    %144 = vmatprep.subr.bf16.mxu0 0
    %145 = vmatpush1.bf16.msra.mxu0 %v118
    %146 = vmatprep.subr.bf16.mxu0 0
    %147 = vmatpush2.bf16.msra.mxu0 0
    %148 = vmatprep.subr.bf16.mxu0 0
    %149 = vmatpush2.bf16.msra.mxu0 0
    %150 = vmatprep.subr.bf16.mxu0 0
    %151 = vmatpush2.bf16.msra.mxu0 0
    %152 = vmatprep.subr.bf16.mxu0 0
    %153 = vmatpush2.bf16.msra.mxu0 0
    %154 = vmatprep.subr.bf16.mxu0 0
    %155 = vmatpush2.bf16.msra.mxu0 0
    %156 = vmatprep.subr.bf16.mxu0 0
    %157 = vmatpush2.bf16.msra.mxu0 0
    %158 = vmatprep.subr.bf16.mxu0 0
    %159 = vmatpush2.bf16.msra.mxu0 0
    %160 = vmatprep.subr.bf16.mxu0 0
    %161 = vmatpush2.bf16.msra.mxu0 0
    %162 = vmatprep.mubr.bf16.mxu0 0
    %163 = vmatmul.mubr.bf16.gmra.mxu0 %v128
    %v164 = vpop.f32.mrf.mxu0
    %v165 = vadd.f32 %v100, %v164
    %v166 = vpop.f32.mrf.mxu0
    %v167 = vpop.f32.mrf.mxu0
    %v168 = vpop.f32.mrf.mxu0
    %169 = vdwg.mxu0
    %vm170 = vcmp.ge.f32.partialorder %v165, 0.0
    %v171 = vmul.f32 %v165, 0.2
    %v172 = vsel %vm170, %v165, %v171
    %v173 = vpack.c.bf16 %v172, %v172
    %v174 = vld [vmem:[%s3] sm:$0xf]
    %v175 = vld [vmem:[%s3 + $0x4] sm:$0xf]
    %v176 = vld [vmem:[%s3 + $0x8] sm:$0xf]
    %v177 = vld [vmem:[%s3 + $0xc] sm:$0xf]
    %v178 = vld [vmem:[%s3 + $0x10] sm:$0xf]
    %v179 = vld [vmem:[%s3 + $0x14] sm:$0xf]
    %v180 = vld [vmem:[%s3 + $0x18] sm:$0xf]
    %v181 = vld [vmem:[%s3 + $0x1c] sm:$0xf]
    %v182 = vld [vmem:[#allocation2] sm:$0x1]
    %v184 = vlaneseq
    %v185 = vshrl.u32 %v184, 7
    %v186 = vsub.s32 0, %v185
    %v187 = vrot.slane %v182, %v186
    %v197 = vunpack.c.l.b16 %v174
    %v198 = vunpack.c.l.b16 %v175
    %v199 = vunpack.c.l.b16 %v176
    %v200 = vunpack.c.l.b16 %v177
    %v201 = vunpack.c.l.b16 %v178
    %v202 = vunpack.c.l.b16 %v179
    %v203 = vunpack.c.l.b16 %v180
    %v204 = vunpack.c.l.b16 %v181
    %v205 = vpack.c.b16 %v198, %v197
    %v206 = vpack.c.b16 %v200, %v199
    %v207 = vpack.c.b16 %v202, %v201
    %v208 = vpack.c.b16 %v204, %v203
    %v214 = vsel %vm126, %v173, 0
    %216 = vmatprep.subr.bf16.mxu0 0
    %217 = vmatpush1.bf16.msra.mxu0 0
    %218 = vmatprep.subr.bf16.mxu0 0
    %219 = vmatpush1.bf16.msra.mxu0 0
    %220 = vmatprep.subr.bf16.mxu0 0
    %221 = vmatpush1.bf16.msra.mxu0 0
    %222 = vmatprep.subr.bf16.mxu0 0
    %223 = vmatpush1.bf16.msra.mxu0 0
    %224 = vmatprep.subr.bf16.mxu0 0
    %225 = vmatpush1.bf16.msra.mxu0 %v208
    %226 = vmatprep.subr.bf16.mxu0 0
    %227 = vmatpush1.bf16.msra.mxu0 %v207
    %228 = vmatprep.subr.bf16.mxu0 0
    %229 = vmatpush1.bf16.msra.mxu0 %v206
    %230 = vmatprep.subr.bf16.mxu0 0
    %231 = vmatpush1.bf16.msra.mxu0 %v205
    %232 = vmatprep.subr.bf16.mxu0 0
    %233 = vmatpush2.bf16.msra.mxu0 0
    %234 = vmatprep.subr.bf16.mxu0 0
    %235 = vmatpush2.bf16.msra.mxu0 0
    %236 = vmatprep.subr.bf16.mxu0 0
    %237 = vmatpush2.bf16.msra.mxu0 0
    %238 = vmatprep.subr.bf16.mxu0 0
    %239 = vmatpush2.bf16.msra.mxu0 0
    %240 = vmatprep.subr.bf16.mxu0 0
    %241 = vmatpush2.bf16.msra.mxu0 0
    %242 = vmatprep.subr.bf16.mxu0 0
    %243 = vmatpush2.bf16.msra.mxu0 0
    %244 = vmatprep.subr.bf16.mxu0 0
    %245 = vmatpush2.bf16.msra.mxu0 0
    %246 = vmatprep.subr.bf16.mxu0 0
    %247 = vmatpush2.bf16.msra.mxu0 0
    %248 = vmatprep.mubr.bf16.mxu0 0
    %249 = vmatmul.mubr.bf16.gmra.mxu0 %v214
    %v250 = vpop.f32.mrf.mxu0
    %v251 = vadd.f32 %v187, %v250
    %v252 = vpop.f32.mrf.mxu0
    %v253 = vpop.f32.mrf.mxu0
    %v254 = vpop.f32.mrf.mxu0
    %255 = vdwg.mxu0
    %vm256 = vcmp.ge.f32.partialorder %v251, 0.0
    %v257 = vmul.f32 %v251, 0.2
    %v258 = vsel %vm256, %v251, %v257
    %v259 = vpack.c.bf16 %v258, %v258
    %v260 = vld [vmem:[%s5] sm:$0xff]
    %v261 = vld [vmem:[%s5 + $0x8] sm:$0xff]
    %v262 = vld [vmem:[%s5 + $0x10] sm:$0xff]
    %v263 = vld [vmem:[%s5 + $0x18] sm:$0xff]
    %v264 = vld [vmem:[%s5 + $0x20] sm:$0xff]
    %v265 = vld [vmem:[%s5 + $0x28] sm:$0xff]
    %v266 = vld [vmem:[%s5 + $0x30] sm:$0xff]
    %v267 = vld [vmem:[%s5 + $0x38] sm:$0xff]
    %v268 = vld [vmem:[%s5 + $0x40] sm:$0xff]
    %v269 = vld [vmem:[%s5 + $0x48] sm:$0xff]
    %v270 = vld [vmem:[%s5 + $0x50] sm:$0xff]
    %v271 = vld [vmem:[%s5 + $0x58] sm:$0xff]
    %v272 = vld [vmem:[%s5 + $0x60] sm:$0xff]
    %v273 = vld [vmem:[%s5 + $0x68] sm:$0xff]
    %v274 = vld [vmem:[%s5 + $0x70] sm:$0xff]
    %v275 = vld [vmem:[%s5 + $0x78] sm:$0xff]
    %v276 = vld [vmem:[%s6] sm:$0x3]
    %v278 = vlaneseq
    %v279 = vshrl.u32 %v278, 7
    %v280 = vsub.s32 0, %v279
    %v281 = vrot.slane %v276, %v280
    %v282 = vlaneseq
    %v283 = vshrl.u32 %v282, 7
    %v284 = vsub.s32 1, %v283
    %v285 = vrot.slane %v276, %v284
    %v304 = vunpack.c.l.b16 %v260
    %v305 = vunpack.c.h.b16 %v260
    %v306 = vunpack.c.l.b16 %v261
    %v307 = vunpack.c.h.b16 %v261
    %v308 = vunpack.c.l.b16 %v262
    %v309 = vunpack.c.h.b16 %v262
    %v310 = vunpack.c.l.b16 %v263
    %v311 = vunpack.c.h.b16 %v263
    %v312 = vunpack.c.l.b16 %v264
    %v313 = vunpack.c.h.b16 %v264
    %v314 = vunpack.c.l.b16 %v265
    %v315 = vunpack.c.h.b16 %v265
    %v316 = vunpack.c.l.b16 %v266
    %v317 = vunpack.c.h.b16 %v266
    %v318 = vunpack.c.l.b16 %v267
    %v319 = vunpack.c.h.b16 %v267
    %v320 = vunpack.c.l.b16 %v268
    %v321 = vunpack.c.h.b16 %v268
    %v322 = vunpack.c.l.b16 %v269
    %v323 = vunpack.c.h.b16 %v269
    %v324 = vunpack.c.l.b16 %v270
    %v325 = vunpack.c.h.b16 %v270
    %v326 = vunpack.c.l.b16 %v271
    %v327 = vunpack.c.h.b16 %v271
    %v328 = vunpack.c.l.b16 %v272
    %v329 = vunpack.c.h.b16 %v272
    %v330 = vunpack.c.l.b16 %v273
    %v331 = vunpack.c.h.b16 %v273
    %v332 = vunpack.c.l.b16 %v274
    %v333 = vunpack.c.h.b16 %v274
    %v334 = vunpack.c.l.b16 %v275
    %v335 = vunpack.c.h.b16 %v275
    %v336 = vpack.c.b16 %v306, %v304
    %v337 = vpack.c.b16 %v307, %v305
    %v338 = vpack.c.b16 %v310, %v308
    %v339 = vpack.c.b16 %v311, %v309
    %v340 = vpack.c.b16 %v314, %v312
    %v341 = vpack.c.b16 %v315, %v313
    %v342 = vpack.c.b16 %v318, %v316
    %v343 = vpack.c.b16 %v319, %v317
    %v344 = vpack.c.b16 %v322, %v320
    %v345 = vpack.c.b16 %v323, %v321
    %v346 = vpack.c.b16 %v326, %v324
    %v347 = vpack.c.b16 %v327, %v325
    %v348 = vpack.c.b16 %v330, %v328
    %v349 = vpack.c.b16 %v331, %v329
    %v350 = vpack.c.b16 %v334, %v332
    %v351 = vpack.c.b16 %v335, %v333
    %368 = vmatprep.subr.bf16.mxu0 %v351
    %369 = vmatpush1.bf16.msra.mxu0 %v350
    %370 = vmatprep.subr.bf16.mxu0 %v349
    %371 = vmatpush1.bf16.msra.mxu0 %v348
    %372 = vmatprep.subr.bf16.mxu0 %v347
    %373 = vmatpush1.bf16.msra.mxu0 %v346
    %374 = vmatprep.subr.bf16.mxu0 %v345
    %375 = vmatpush1.bf16.msra.mxu0 %v344
    %376 = vmatprep.subr.bf16.mxu0 %v343
    %377 = vmatpush1.bf16.msra.mxu0 %v342
    %378 = vmatprep.subr.bf16.mxu0 %v341
    %379 = vmatpush1.bf16.msra.mxu0 %v340
    %380 = vmatprep.subr.bf16.mxu0 %v339
    %381 = vmatpush1.bf16.msra.mxu0 %v338
    %382 = vmatprep.subr.bf16.mxu0 %v337
    %383 = vmatpush1.bf16.msra.mxu0 %v336
    %384 = vmatprep.subr.bf16.mxu0 0
    %385 = vmatpush2.bf16.msra.mxu0 0
    %386 = vmatprep.subr.bf16.mxu0 0
    %387 = vmatpush2.bf16.msra.mxu0 0
    %388 = vmatprep.subr.bf16.mxu0 0
    %389 = vmatpush2.bf16.msra.mxu0 0
    %390 = vmatprep.subr.bf16.mxu0 0
    %391 = vmatpush2.bf16.msra.mxu0 0
    %392 = vmatprep.subr.bf16.mxu0 0
    %393 = vmatpush2.bf16.msra.mxu0 0
    %394 = vmatprep.subr.bf16.mxu0 0
    %395 = vmatpush2.bf16.msra.mxu0 0
    %396 = vmatprep.subr.bf16.mxu0 0
    %397 = vmatpush2.bf16.msra.mxu0 0
    %398 = vmatprep.subr.bf16.mxu0 0
    %399 = vmatpush2.bf16.msra.mxu0 0
    %400 = vmatprep.mubr.bf16.mxu0 0
    %401 = vmatmul.mubr.bf16.gmra.mxu0 %v259
    %v402 = vpop.f32.mrf.mxu0
    %v403 = vadd.f32 %v281, %v402
    %v404 = vpop.f32.mrf.mxu0
    %v405 = vadd.f32 %v285, %v404
    %v406 = vpop.f32.mrf.mxu0
    %v407 = vpop.f32.mrf.mxu0
    %408 = vdwg.mxu0
    %vm409 = vcmp.ge.f32.partialorder %v403, 0.0
    %vm410 = vcmp.ge.f32.partialorder %v405, 0.0
    %v411 = vmul.f32 %v403, 0.2
    %v412 = vmul.f32 %v405, 0.2
    %v413 = vsel %vm409, %v403, %v411
    %v414 = vsel %vm410, %v405, %v412
    %v415 = vpack.c.bf16 %v413, %v413
    %v416 = vpack.c.bf16 %v414, %v414
    %v417 = vld [vmem:[#allocation5] sm:$0xff]
    %v418 = vld [vmem:[#allocation5 + $0x8] sm:$0xff]
    %v419 = vld [vmem:[#allocation5 + $0x10] sm:$0xff]
    %v420 = vld [vmem:[#allocation5 + $0x18] sm:$0xff]
    %v421 = vld [vmem:[#allocation5 + $0x20] sm:$0xff]
    %v422 = vld [vmem:[#allocation5 + $0x28] sm:$0xff]
    %v423 = vld [vmem:[#allocation5 + $0x30] sm:$0xff]
    %v424 = vld [vmem:[#allocation5 + $0x38] sm:$0xff]
    %v425 = vld [vmem:[#allocation5 + $0x40] sm:$0xff]
    %v426 = vld [vmem:[#allocation5 + $0x48] sm:$0xff]
    %v427 = vld [vmem:[#allocation5 + $0x50] sm:$0xff]
    %v428 = vld [vmem:[#allocation5 + $0x58] sm:$0xff]
    %v429 = vld [vmem:[#allocation5 + $0x60] sm:$0xff]
    %v430 = vld [vmem:[#allocation5 + $0x68] sm:$0xff]
    %v431 = vld [vmem:[#allocation5 + $0x70] sm:$0xff]
    %v432 = vld [vmem:[#allocation5 + $0x78] sm:$0xff]
    %v433 = vld [vmem:[#allocation5 + $0x80] sm:$0xff]
    %v434 = vld [vmem:[#allocation5 + $0x88] sm:$0xff]
    %v435 = vld [vmem:[#allocation5 + $0x90] sm:$0xff]
    %v436 = vld [vmem:[#allocation5 + $0x98] sm:$0xff]
    %v437 = vld [vmem:[#allocation5 + $0xa0] sm:$0xff]
    %v438 = vld [vmem:[#allocation5 + $0xa8] sm:$0xff]
    %v439 = vld [vmem:[#allocation5 + $0xb0] sm:$0xff]
    %v440 = vld [vmem:[#allocation5 + $0xb8] sm:$0xff]
    %v441 = vld [vmem:[#allocation5 + $0xc0] sm:$0xff]
    %v442 = vld [vmem:[#allocation5 + $0xc8] sm:$0xff]
    %v443 = vld [vmem:[#allocation5 + $0xd0] sm:$0xff]
    %v444 = vld [vmem:[#allocation5 + $0xd8] sm:$0xff]
    %v445 = vld [vmem:[#allocation5 + $0xe0] sm:$0xff]
    %v446 = vld [vmem:[#allocation5 + $0xe8] sm:$0xff]
    %v447 = vld [vmem:[#allocation5 + $0xf0] sm:$0xff]
    %v448 = vld [vmem:[#allocation5 + $0xf8] sm:$0xff]
    %v449 = vld [vmem:[%s8] sm:$0x3]
    %v451 = vlaneseq
    %v452 = vshrl.u32 %v451, 7
    %v453 = vsub.s32 0, %v452
    %v454 = vrot.slane %v449, %v453
    %v455 = vlaneseq
    %v456 = vshrl.u32 %v455, 7
    %v457 = vsub.s32 1, %v456
    %v458 = vrot.slane %v449, %v457
    %v493 = vunpack.c.l.b16 %v417
    %v494 = vunpack.c.h.b16 %v417
    %v495 = vunpack.c.l.b16 %v418
    %v496 = vunpack.c.h.b16 %v418
    %v497 = vunpack.c.l.b16 %v419
    %v498 = vunpack.c.h.b16 %v419
    %v499 = vunpack.c.l.b16 %v420
    %v500 = vunpack.c.h.b16 %v420
    %v501 = vunpack.c.l.b16 %v421
    %v502 = vunpack.c.h.b16 %v421
    %v503 = vunpack.c.l.b16 %v422
    %v504 = vunpack.c.h.b16 %v422
    %v505 = vunpack.c.l.b16 %v423
    %v506 = vunpack.c.h.b16 %v423
    %v507 = vunpack.c.l.b16 %v424
    %v508 = vunpack.c.h.b16 %v424
    %v509 = vunpack.c.l.b16 %v425
    %v510 = vunpack.c.h.b16 %v425
    %v511 = vunpack.c.l.b16 %v426
    %v512 = vunpack.c.h.b16 %v426
    %v513 = vunpack.c.l.b16 %v427
    %v514 = vunpack.c.h.b16 %v427
    %v515 = vunpack.c.l.b16 %v428
    %v516 = vunpack.c.h.b16 %v428
    %v517 = vunpack.c.l.b16 %v429
    %v518 = vunpack.c.h.b16 %v429
    %v519 = vunpack.c.l.b16 %v430
    %v520 = vunpack.c.h.b16 %v430
    %v521 = vunpack.c.l.b16 %v431
    %v522 = vunpack.c.h.b16 %v431
    %v523 = vunpack.c.l.b16 %v432
    %v524 = vunpack.c.h.b16 %v432
    %v525 = vunpack.c.l.b16 %v433
    %v526 = vunpack.c.h.b16 %v433
    %v527 = vunpack.c.l.b16 %v434
    %v528 = vunpack.c.h.b16 %v434
    %v529 = vunpack.c.l.b16 %v435
    %v530 = vunpack.c.h.b16 %v435
    %v531 = vunpack.c.l.b16 %v436
    %v532 = vunpack.c.h.b16 %v436
    %v533 = vunpack.c.l.b16 %v437
    %v534 = vunpack.c.h.b16 %v437
    %v535 = vunpack.c.l.b16 %v438
    %v536 = vunpack.c.h.b16 %v438
    %v537 = vunpack.c.l.b16 %v439
    %v538 = vunpack.c.h.b16 %v439
    %v539 = vunpack.c.l.b16 %v440
    %v540 = vunpack.c.h.b16 %v440
    %v541 = vunpack.c.l.b16 %v441
    %v542 = vunpack.c.h.b16 %v441
    %v543 = vunpack.c.l.b16 %v442
    %v544 = vunpack.c.h.b16 %v442
    %v545 = vunpack.c.l.b16 %v443
    %v546 = vunpack.c.h.b16 %v443
    %v547 = vunpack.c.l.b16 %v444
    %v548 = vunpack.c.h.b16 %v444
    %v549 = vunpack.c.l.b16 %v445
    %v550 = vunpack.c.h.b16 %v445
    %v551 = vunpack.c.l.b16 %v446
    %v552 = vunpack.c.h.b16 %v446
    %v553 = vunpack.c.l.b16 %v447
    %v554 = vunpack.c.h.b16 %v447
    %v555 = vunpack.c.l.b16 %v448
    %v556 = vunpack.c.h.b16 %v448
    %v557 = vpack.c.b16 %v495, %v493
    %v558 = vpack.c.b16 %v496, %v494
    %v559 = vpack.c.b16 %v499, %v497
    %v560 = vpack.c.b16 %v500, %v498
    %v561 = vpack.c.b16 %v503, %v501
    %v562 = vpack.c.b16 %v504, %v502
    %v563 = vpack.c.b16 %v507, %v505
    %v564 = vpack.c.b16 %v508, %v506
    %v565 = vpack.c.b16 %v511, %v509
    %v566 = vpack.c.b16 %v512, %v510
    %v567 = vpack.c.b16 %v515, %v513
    %v568 = vpack.c.b16 %v516, %v514
    %v569 = vpack.c.b16 %v519, %v517
    %v570 = vpack.c.b16 %v520, %v518
    %v571 = vpack.c.b16 %v523, %v521
    %v572 = vpack.c.b16 %v524, %v522
    %v573 = vpack.c.b16 %v527, %v525
    %v574 = vpack.c.b16 %v528, %v526
    %v575 = vpack.c.b16 %v531, %v529
    %v576 = vpack.c.b16 %v532, %v530
    %v577 = vpack.c.b16 %v535, %v533
    %v578 = vpack.c.b16 %v536, %v534
    %v579 = vpack.c.b16 %v539, %v537
    %v580 = vpack.c.b16 %v540, %v538
    %v581 = vpack.c.b16 %v543, %v541
    %v582 = vpack.c.b16 %v544, %v542
    %v583 = vpack.c.b16 %v547, %v545
    %v584 = vpack.c.b16 %v548, %v546
    %v585 = vpack.c.b16 %v551, %v549
    %v586 = vpack.c.b16 %v552, %v550
    %v587 = vpack.c.b16 %v555, %v553
    %v588 = vpack.c.b16 %v556, %v554
    %621 = vmatprep.subr.bf16.mxu0 %v572
    %622 = vmatpush1.bf16.msra.mxu0 %v571
    %623 = vmatprep.subr.bf16.mxu0 %v570
    %624 = vmatpush1.bf16.msra.mxu0 %v569
    %625 = vmatprep.subr.bf16.mxu0 %v568
    %626 = vmatpush1.bf16.msra.mxu0 %v567
    %627 = vmatprep.subr.bf16.mxu0 %v566
    %628 = vmatpush1.bf16.msra.mxu0 %v565
    %629 = vmatprep.subr.bf16.mxu0 %v564
    %630 = vmatpush1.bf16.msra.mxu0 %v563
    %631 = vmatprep.subr.bf16.mxu0 %v562
    %632 = vmatpush1.bf16.msra.mxu0 %v561
    %633 = vmatprep.subr.bf16.mxu0 %v560
    %634 = vmatpush1.bf16.msra.mxu0 %v559
    %635 = vmatprep.subr.bf16.mxu0 %v558
    %636 = vmatpush1.bf16.msra.mxu0 %v557
    %637 = vmatprep.subr.bf16.mxu0 %v588
    %638 = vmatpush2.bf16.msra.mxu0 %v587
    %639 = vmatprep.subr.bf16.mxu0 %v586
    %640 = vmatpush2.bf16.msra.mxu0 %v585
    %641 = vmatprep.subr.bf16.mxu0 %v584
    %642 = vmatpush2.bf16.msra.mxu0 %v583
    %643 = vmatprep.subr.bf16.mxu0 %v582
    %644 = vmatpush2.bf16.msra.mxu0 %v581
    %645 = vmatprep.subr.bf16.mxu0 %v580
    %646 = vmatpush2.bf16.msra.mxu0 %v579
    %647 = vmatprep.subr.bf16.mxu0 %v578
    %648 = vmatpush2.bf16.msra.mxu0 %v577
    %649 = vmatprep.subr.bf16.mxu0 %v576
    %650 = vmatpush2.bf16.msra.mxu0 %v575
    %651 = vmatprep.subr.bf16.mxu0 %v574
    %652 = vmatpush2.bf16.msra.mxu0 %v573
    %653 = vmatprep.mubr.bf16.mxu0 %v416
    %654 = vmatmul.mubr.bf16.gmra.mxu0 %v415
    %v655 = vpop.f32.mrf.mxu0
    %v656 = vadd.f32 %v454, %v655
    %v657 = vpop.f32.mrf.mxu0
    %v658 = vadd.f32 %v458, %v657
    %v659 = vpop.f32.mrf.mxu0
    %v660 = vpop.f32.mrf.mxu0
    %661 = vdwg.mxu0
    %vm662 = vcmp.ge.f32.partialorder %v656, 0.0
    %vm663 = vcmp.ge.f32.partialorder %v658, 0.0
    %v664 = vmul.f32 %v656, 0.2
    %v665 = vmul.f32 %v658, 0.2
    %v666 = vsel %vm662, %v656, %v664
    %v667 = vsel %vm663, %v658, %v665
    %v668 = vpack.c.bf16 %v666, %v666
    %v669 = vpack.c.bf16 %v667, %v667
    %v670 = vld [vmem:[#allocation7] sm:$0xff]
    %v671 = vld [vmem:[#allocation7 + $0x8] sm:$0xff]
    %v672 = vld [vmem:[#allocation7 + $0x10] sm:$0xff]
    %v673 = vld [vmem:[#allocation7 + $0x18] sm:$0xff]
    %v674 = vld [vmem:[#allocation7 + $0x20] sm:$0xff]
    %v675 = vld [vmem:[#allocation7 + $0x28] sm:$0xff]
    %v676 = vld [vmem:[#allocation7 + $0x30] sm:$0xff]
    %v677 = vld [vmem:[#allocation7 + $0x38] sm:$0xff]
    %v678 = vld [vmem:[#allocation7 + $0x40] sm:$0xff]
    %v679 = vld [vmem:[#allocation7 + $0x48] sm:$0xff]
    %v680 = vld [vmem:[#allocation7 + $0x50] sm:$0xff]
    %v681 = vld [vmem:[#allocation7 + $0x58] sm:$0xff]
    %v682 = vld [vmem:[#allocation7 + $0x60] sm:$0xff]
    %v683 = vld [vmem:[#allocation7 + $0x68] sm:$0xff]
    %v684 = vld [vmem:[#allocation7 + $0x70] sm:$0xff]
    %v685 = vld [vmem:[#allocation7 + $0x78] sm:$0xff]
    %v686 = vld [vmem:[#allocation7 + $0x80] sm:$0xff]
    %v687 = vld [vmem:[#allocation7 + $0x88] sm:$0xff]
    %v688 = vld [vmem:[#allocation7 + $0x90] sm:$0xff]
    %v689 = vld [vmem:[#allocation7 + $0x98] sm:$0xff]
    %v690 = vld [vmem:[#allocation7 + $0xa0] sm:$0xff]
    %v691 = vld [vmem:[#allocation7 + $0xa8] sm:$0xff]
    %v692 = vld [vmem:[#allocation7 + $0xb0] sm:$0xff]
    %v693 = vld [vmem:[#allocation7 + $0xb8] sm:$0xff]
    %v694 = vld [vmem:[#allocation7 + $0xc0] sm:$0xff]
    %v695 = vld [vmem:[#allocation7 + $0xc8] sm:$0xff]
    %v696 = vld [vmem:[#allocation7 + $0xd0] sm:$0xff]
    %v697 = vld [vmem:[#allocation7 + $0xd8] sm:$0xff]
    %v698 = vld [vmem:[#allocation7 + $0xe0] sm:$0xff]
    %v699 = vld [vmem:[#allocation7 + $0xe8] sm:$0xff]
    %v700 = vld [vmem:[#allocation7 + $0xf0] sm:$0xff]
    %v701 = vld [vmem:[#allocation7 + $0xf8] sm:$0xff]
    %v702 = vld [vmem:[%s10] sm:$0x3]
    %v704 = vlaneseq
    %v705 = vshrl.u32 %v704, 7
    %v706 = vsub.s32 0, %v705
    %v707 = vrot.slane %v702, %v706
    %v708 = vlaneseq
    %v709 = vshrl.u32 %v708, 7
    %v710 = vsub.s32 1, %v709
    %v711 = vrot.slane %v702, %v710
    %v746 = vunpack.c.l.b16 %v670
    %v747 = vunpack.c.h.b16 %v670
    %v748 = vunpack.c.l.b16 %v671
    %v749 = vunpack.c.h.b16 %v671
    %v750 = vunpack.c.l.b16 %v672
    %v751 = vunpack.c.h.b16 %v672
    %v752 = vunpack.c.l.b16 %v673
    %v753 = vunpack.c.h.b16 %v673
    %v754 = vunpack.c.l.b16 %v674
    %v755 = vunpack.c.h.b16 %v674
    %v756 = vunpack.c.l.b16 %v675
    %v757 = vunpack.c.h.b16 %v675
    %v758 = vunpack.c.l.b16 %v676
    %v759 = vunpack.c.h.b16 %v676
    %v760 = vunpack.c.l.b16 %v677
    %v761 = vunpack.c.h.b16 %v677
    %v762 = vunpack.c.l.b16 %v678
    %v763 = vunpack.c.h.b16 %v678
    %v764 = vunpack.c.l.b16 %v679
    %v765 = vunpack.c.h.b16 %v679
    %v766 = vunpack.c.l.b16 %v680
    %v767 = vunpack.c.h.b16 %v680
    %v768 = vunpack.c.l.b16 %v681
    %v769 = vunpack.c.h.b16 %v681
    %v770 = vunpack.c.l.b16 %v682
    %v771 = vunpack.c.h.b16 %v682
    %v772 = vunpack.c.l.b16 %v683
    %v773 = vunpack.c.h.b16 %v683
    %v774 = vunpack.c.l.b16 %v684
    %v775 = vunpack.c.h.b16 %v684
    %v776 = vunpack.c.l.b16 %v685
    %v777 = vunpack.c.h.b16 %v685
    %v778 = vunpack.c.l.b16 %v686
    %v779 = vunpack.c.h.b16 %v686
    %v780 = vunpack.c.l.b16 %v687
    %v781 = vunpack.c.h.b16 %v687
    %v782 = vunpack.c.l.b16 %v688
    %v783 = vunpack.c.h.b16 %v688
    %v784 = vunpack.c.l.b16 %v689
    %v785 = vunpack.c.h.b16 %v689
    %v786 = vunpack.c.l.b16 %v690
    %v787 = vunpack.c.h.b16 %v690
    %v788 = vunpack.c.l.b16 %v691
    %v789 = vunpack.c.h.b16 %v691
    %v790 = vunpack.c.l.b16 %v692
    %v791 = vunpack.c.h.b16 %v692
    %v792 = vunpack.c.l.b16 %v693
    %v793 = vunpack.c.h.b16 %v693
    %v794 = vunpack.c.l.b16 %v694
    %v795 = vunpack.c.h.b16 %v694
    %v796 = vunpack.c.l.b16 %v695
    %v797 = vunpack.c.h.b16 %v695
    %v798 = vunpack.c.l.b16 %v696
    %v799 = vunpack.c.h.b16 %v696
    %v800 = vunpack.c.l.b16 %v697
    %v801 = vunpack.c.h.b16 %v697
    %v802 = vunpack.c.l.b16 %v698
    %v803 = vunpack.c.h.b16 %v698
    %v804 = vunpack.c.l.b16 %v699
    %v805 = vunpack.c.h.b16 %v699
    %v806 = vunpack.c.l.b16 %v700
    %v807 = vunpack.c.h.b16 %v700
    %v808 = vunpack.c.l.b16 %v701
    %v809 = vunpack.c.h.b16 %v701
    %v810 = vpack.c.b16 %v748, %v746
    %v811 = vpack.c.b16 %v749, %v747
    %v812 = vpack.c.b16 %v752, %v750
    %v813 = vpack.c.b16 %v753, %v751
    %v814 = vpack.c.b16 %v756, %v754
    %v815 = vpack.c.b16 %v757, %v755
    %v816 = vpack.c.b16 %v760, %v758
    %v817 = vpack.c.b16 %v761, %v759
    %v818 = vpack.c.b16 %v764, %v762
    %v819 = vpack.c.b16 %v765, %v763
    %v820 = vpack.c.b16 %v768, %v766
    %v821 = vpack.c.b16 %v769, %v767
    %v822 = vpack.c.b16 %v772, %v770
    %v823 = vpack.c.b16 %v773, %v771
    %v824 = vpack.c.b16 %v776, %v774
    %v825 = vpack.c.b16 %v777, %v775
    %v826 = vpack.c.b16 %v780, %v778
    %v827 = vpack.c.b16 %v781, %v779
    %v828 = vpack.c.b16 %v784, %v782
    %v829 = vpack.c.b16 %v785, %v783
    %v830 = vpack.c.b16 %v788, %v786
    %v831 = vpack.c.b16 %v789, %v787
    %v832 = vpack.c.b16 %v792, %v790
    %v833 = vpack.c.b16 %v793, %v791
    %v834 = vpack.c.b16 %v796, %v794
    %v835 = vpack.c.b16 %v797, %v795
    %v836 = vpack.c.b16 %v800, %v798
    %v837 = vpack.c.b16 %v801, %v799
    %v838 = vpack.c.b16 %v804, %v802
    %v839 = vpack.c.b16 %v805, %v803
    %v840 = vpack.c.b16 %v808, %v806
    %v841 = vpack.c.b16 %v809, %v807
    %874 = vmatprep.subr.bf16.mxu0 %v825
    %875 = vmatpush1.bf16.msra.mxu0 %v824
    %876 = vmatprep.subr.bf16.mxu0 %v823
    %877 = vmatpush1.bf16.msra.mxu0 %v822
    %878 = vmatprep.subr.bf16.mxu0 %v821
    %879 = vmatpush1.bf16.msra.mxu0 %v820
    %880 = vmatprep.subr.bf16.mxu0 %v819
    %881 = vmatpush1.bf16.msra.mxu0 %v818
    %882 = vmatprep.subr.bf16.mxu0 %v817
    %883 = vmatpush1.bf16.msra.mxu0 %v816
    %884 = vmatprep.subr.bf16.mxu0 %v815
    %885 = vmatpush1.bf16.msra.mxu0 %v814
    %886 = vmatprep.subr.bf16.mxu0 %v813
    %887 = vmatpush1.bf16.msra.mxu0 %v812
    %888 = vmatprep.subr.bf16.mxu0 %v811
    %889 = vmatpush1.bf16.msra.mxu0 %v810
    %890 = vmatprep.subr.bf16.mxu0 %v841
    %891 = vmatpush2.bf16.msra.mxu0 %v840
    %892 = vmatprep.subr.bf16.mxu0 %v839
    %893 = vmatpush2.bf16.msra.mxu0 %v838
    %894 = vmatprep.subr.bf16.mxu0 %v837
    %895 = vmatpush2.bf16.msra.mxu0 %v836
    %896 = vmatprep.subr.bf16.mxu0 %v835
    %897 = vmatpush2.bf16.msra.mxu0 %v834
    %898 = vmatprep.subr.bf16.mxu0 %v833
    %899 = vmatpush2.bf16.msra.mxu0 %v832
    %900 = vmatprep.subr.bf16.mxu0 %v831
    %901 = vmatpush2.bf16.msra.mxu0 %v830
    %902 = vmatprep.subr.bf16.mxu0 %v829
    %903 = vmatpush2.bf16.msra.mxu0 %v828
    %904 = vmatprep.subr.bf16.mxu0 %v827
    %905 = vmatpush2.bf16.msra.mxu0 %v826
    %906 = vmatprep.mubr.bf16.mxu0 %v669
    %907 = vmatmul.mubr.bf16.gmra.mxu0 %v668
    %v908 = vpop.f32.mrf.mxu0
    %v909 = vadd.f32 %v707, %v908
    %v910 = vpop.f32.mrf.mxu0
    %v911 = vadd.f32 %v711, %v910
    %v912 = vpop.f32.mrf.mxu0
    %v913 = vpop.f32.mrf.mxu0
    %914 = vdwg.mxu0
    %vm915 = vcmp.ge.f32.partialorder %v909, 0.0
    %vm916 = vcmp.ge.f32.partialorder %v911, 0.0
    %v917 = vmul.f32 %v909, 0.2
    %v918 = vmul.f32 %v911, 0.2
    %v919 = vsel %vm915, %v909, %v917
    %v920 = vsel %vm916, %v911, %v918
    %v921 = vpack.c.bf16 %v919, %v919
    %v922 = vpack.c.bf16 %v920, %v920
    %v923 = vld [vmem:[%s11] sm:$0xf]
    %v924 = vld [vmem:[%s11 + $0x4] sm:$0xf]
    %v925 = vld [vmem:[%s11 + $0x8] sm:$0xf]
    %v926 = vld [vmem:[%s11 + $0xc] sm:$0xf]
    %v927 = vld [vmem:[%s11 + $0x10] sm:$0xf]
    %v928 = vld [vmem:[%s11 + $0x14] sm:$0xf]
    %v929 = vld [vmem:[%s11 + $0x18] sm:$0xf]
    %v930 = vld [vmem:[%s11 + $0x1c] sm:$0xf]
    %v931 = vld [vmem:[%s11 + $0x20] sm:$0xf]
    %v932 = vld [vmem:[%s11 + $0x24] sm:$0xf]
    %v933 = vld [vmem:[%s11 + $0x28] sm:$0xf]
    %v934 = vld [vmem:[%s11 + $0x2c] sm:$0xf]
    %v935 = vld [vmem:[%s11 + $0x30] sm:$0xf]
    %v936 = vld [vmem:[%s11 + $0x34] sm:$0xf]
    %v937 = vld [vmem:[%s11 + $0x38] sm:$0xf]
    %v938 = vld [vmem:[%s11 + $0x3c] sm:$0xf]
    %v939 = vld [vmem:[%s11 + $0x40] sm:$0xf]
    %v940 = vld [vmem:[%s11 + $0x44] sm:$0xf]
    %v941 = vld [vmem:[%s11 + $0x48] sm:$0xf]
    %v942 = vld [vmem:[%s11 + $0x4c] sm:$0xf]
    %v943 = vld [vmem:[%s11 + $0x50] sm:$0xf]
    %v944 = vld [vmem:[%s11 + $0x54] sm:$0xf]
    %v945 = vld [vmem:[%s11 + $0x58] sm:$0xf]
    %v946 = vld [vmem:[%s11 + $0x5c] sm:$0xf]
    %v947 = vld [vmem:[%s11 + $0x60] sm:$0xf]
    %v948 = vld [vmem:[%s11 + $0x64] sm:$0xf]
    %v949 = vld [vmem:[%s11 + $0x68] sm:$0xf]
    %v950 = vld [vmem:[%s11 + $0x6c] sm:$0xf]
    %v951 = vld [vmem:[%s11 + $0x70] sm:$0xf]
    %v952 = vld [vmem:[%s11 + $0x74] sm:$0xf]
    %v953 = vld [vmem:[%s11 + $0x78] sm:$0xf]
    %v954 = vld [vmem:[%s11 + $0x7c] sm:$0xf]
    %v955 = vld [vmem:[%s12] sm:$0x1]
    %v957 = vlaneseq
    %v958 = vshrl.u32 %v957, 7
    %v959 = vsub.s32 0, %v958
    %v960 = vrot.slane %v955, %v959
    %v994 = vunpack.c.l.b16 %v923
    %v995 = vunpack.c.l.b16 %v924
    %v996 = vunpack.c.l.b16 %v925
    %v997 = vunpack.c.l.b16 %v926
    %v998 = vunpack.c.l.b16 %v927
    %v999 = vunpack.c.l.b16 %v928
    %v1000 = vunpack.c.l.b16 %v929
    %v1001 = vunpack.c.l.b16 %v930
    %v1002 = vunpack.c.l.b16 %v931
    %v1003 = vunpack.c.l.b16 %v932
    %v1004 = vunpack.c.l.b16 %v933
    %v1005 = vunpack.c.l.b16 %v934
    %v1006 = vunpack.c.l.b16 %v935
    %v1007 = vunpack.c.l.b16 %v936
    %v1008 = vunpack.c.l.b16 %v937
    %v1009 = vunpack.c.l.b16 %v938
    %v1010 = vunpack.c.l.b16 %v939
    %v1011 = vunpack.c.l.b16 %v940
    %v1012 = vunpack.c.l.b16 %v941
    %v1013 = vunpack.c.l.b16 %v942
    %v1014 = vunpack.c.l.b16 %v943
    %v1015 = vunpack.c.l.b16 %v944
    %v1016 = vunpack.c.l.b16 %v945
    %v1017 = vunpack.c.l.b16 %v946
    %v1018 = vunpack.c.l.b16 %v947
    %v1019 = vunpack.c.l.b16 %v948
    %v1020 = vunpack.c.l.b16 %v949
    %v1021 = vunpack.c.l.b16 %v950
    %v1022 = vunpack.c.l.b16 %v951
    %v1023 = vunpack.c.l.b16 %v952
    %v1024 = vunpack.c.l.b16 %v953
    %v1025 = vunpack.c.l.b16 %v954
    %v1026 = vpack.c.b16 %v995, %v994
    %v1027 = vpack.c.b16 %v997, %v996
    %v1028 = vpack.c.b16 %v999, %v998
    %v1029 = vpack.c.b16 %v1001, %v1000
    %v1030 = vpack.c.b16 %v1003, %v1002
    %v1031 = vpack.c.b16 %v1005, %v1004
    %v1032 = vpack.c.b16 %v1007, %v1006
    %v1033 = vpack.c.b16 %v1009, %v1008
    %v1034 = vpack.c.b16 %v1011, %v1010
    %v1035 = vpack.c.b16 %v1013, %v1012
    %v1036 = vpack.c.b16 %v1015, %v1014
    %v1037 = vpack.c.b16 %v1017, %v1016
    %v1038 = vpack.c.b16 %v1019, %v1018
    %v1039 = vpack.c.b16 %v1021, %v1020
    %v1040 = vpack.c.b16 %v1023, %v1022
    %v1041 = vpack.c.b16 %v1025, %v1024
    %1058 = vmatprep.subr.bf16.mxu0 0
    %1059 = vmatpush1.bf16.msra.mxu0 %v1033
    %1060 = vmatprep.subr.bf16.mxu0 0
    %1061 = vmatpush1.bf16.msra.mxu0 %v1032
    %1062 = vmatprep.subr.bf16.mxu0 0
    %1063 = vmatpush1.bf16.msra.mxu0 %v1031
    %1064 = vmatprep.subr.bf16.mxu0 0
    %1065 = vmatpush1.bf16.msra.mxu0 %v1030
    %1066 = vmatprep.subr.bf16.mxu0 0
    %1067 = vmatpush1.bf16.msra.mxu0 %v1029
    %1068 = vmatprep.subr.bf16.mxu0 0
    %1069 = vmatpush1.bf16.msra.mxu0 %v1028
    %1070 = vmatprep.subr.bf16.mxu0 0
    %1071 = vmatpush1.bf16.msra.mxu0 %v1027
    %1072 = vmatprep.subr.bf16.mxu0 0
    %1073 = vmatpush1.bf16.msra.mxu0 %v1026
    %1074 = vmatprep.subr.bf16.mxu0 0
    %1075 = vmatpush2.bf16.msra.mxu0 %v1041
    %1076 = vmatprep.subr.bf16.mxu0 0
    %1077 = vmatpush2.bf16.msra.mxu0 %v1040
    %1078 = vmatprep.subr.bf16.mxu0 0
    %1079 = vmatpush2.bf16.msra.mxu0 %v1039
    %1080 = vmatprep.subr.bf16.mxu0 0
    %1081 = vmatpush2.bf16.msra.mxu0 %v1038
    %1082 = vmatprep.subr.bf16.mxu0 0
    %1083 = vmatpush2.bf16.msra.mxu0 %v1037
    %1084 = vmatprep.subr.bf16.mxu0 0
    %1085 = vmatpush2.bf16.msra.mxu0 %v1036
    %1086 = vmatprep.subr.bf16.mxu0 0
    %1087 = vmatpush2.bf16.msra.mxu0 %v1035
    %1088 = vmatprep.subr.bf16.mxu0 0
    %1089 = vmatpush2.bf16.msra.mxu0 %v1034
    %1090 = vmatprep.mubr.bf16.mxu0 %v922
    %1091 = vmatmul.mubr.bf16.gmra.mxu0 %v921
    %v1092 = vpop.f32.mrf.mxu0
    %v1093 = vadd.f32 %v960, %v1092
    %v1094 = vpop.f32.mrf.mxu0
    %v1095 = vpop.f32.mrf.mxu0
    %v1096 = vpop.f32.mrf.mxu0
    %1097 = vdwg.mxu0
    %v1098 = vadd.f32 %v1093, %v85
    %v1099 = vmul.f32 %v1098, 100.0
    %v1100 = vtanh.pop %v1099
    %v1101 = vmul.f32 %v1100, 1.05
    %vm1102 = vcmask 517120
    %1103 = vst.msk [vmem:[#allocation8] sm:$0x3] %vm1102, %v1101
    // Predicated region
    $region66: #{_generator_forward_jit.1} parent=1 // pred_check
      _
    $region67: #{_generator_forward_jit.1} parent=1 // pred_check_branch
      %1105 = sbr.rel (0) target = $region69
    $region68: #{_generator_forward_jit.1} parent=1 // pred_region
      %s1107 = ssub.s32 32, 32
      %1108 = vsyncadd [#allocation4], %s1107
      %s1110 = sshll.u32 [#allocation8], 4
      %s1111 = int_to_ptr.vmem [resolvable:$true] %s1110
      %1113 = dma.vmem_to_hbm [thread:$0]  %s1111, 32, %s13, [#allocation4]
    $region69: #{_generator_forward_jit.1} parent=1 // pred_fallthru
      _
    // Predicated region
    $region70: #{_generator_forward_jit.1} parent=1 // pred_check
      _
    $region71: #{_generator_forward_jit.1} parent=1 // pred_check_branch
      %1115 = sbr.rel (0) target = $region73
    $region72: #{_generator_forward_jit.1} parent=1 // pred_region
      %1116 = dma.done [#allocation4], 32
    $region73: #{_generator_forward_jit.1} parent=1 // pred_fallthru
      _
    %1117 = vsyncpa [#allocation3], 1
    %1118 = vsyncpa [#allocation6], 1
    %1119 = vsyncpa [#allocation4], 1

</llo_original>
